<compile_context>
chip_gen: v6e
topology: v6e:2x2x1
jax: 0.10.0
libtpu: 0.0.40
codegen_flags: <defaults>
</compile_context>

<pallas_src>
import functools

import jax
import jax.numpy as jnp
from jax.experimental import pallas as pl
from jax.experimental.pallas import tpu as pltpu

_HIDDEN = 256   # fixed by the module spec


def _autoencoder_kernel(x_ref,
                        w1_ref, b1_ref,
                        w2_ref, b2_ref,
                        w3_ref, b3_ref,
                        w4_ref, b4_ref,
                        o_ref):
    """Fused encoder+decoder forward on one batch tile."""
    # x arrives f32 from HBM; the bf16 downcast is a free VPU op in-kernel and
    # avoids a separate cast/pad pass over x in the wrapper.
    x = x_ref[...].astype(jnp.bfloat16)

    # Encoder: Linear(input_dim, 256) -> ReLU
    h1 = jnp.dot(x, w1_ref[...], preferred_element_type=jnp.float32) + b1_ref[...]
    h1 = jnp.maximum(h1, 0.0).astype(jnp.bfloat16)

    # Encoder: Linear(256, latent_dim) -> ReLU
    z = jnp.dot(h1, w2_ref[...], preferred_element_type=jnp.float32) + b2_ref[...]
    z = jnp.maximum(z, 0.0).astype(jnp.bfloat16)

    # Decoder: Linear(latent_dim, 256) -> ReLU
    h2 = jnp.dot(z, w3_ref[...], preferred_element_type=jnp.float32) + b3_ref[...]
    h2 = jnp.maximum(h2, 0.0).astype(jnp.bfloat16)

    # Decoder: Linear(256, input_dim)   (no activation)
    y = jnp.dot(h2, w4_ref[...], preferred_element_type=jnp.float32) + b4_ref[...]
    o_ref[...] = y.astype(o_ref.dtype)


@functools.partial(jax.jit, static_argnames=("block_b",))
def autoencoder_forward(x, kparams, block_b=None):
    """x: (B, input_dim) float32.  kparams: prepare_params() output.

    block_b: batch tile (multiple of 8, or None => whole batch in one step).
    Single step (None) is best on single-TC v5e/v6e; use B//2 (or B//2k) on
    v7x so the parallel batch axis can shard across its 2 TensorCores.

    NOTE: if B is not a multiple of block_b, the last input tile contains
    Pallas-padded rows.  This is safe only because each output row depends
    solely on its own input row (no batch-wise reductions).
    """
    B, input_dim = x.shape
    w1, b1 = kparams["w1"], kparams["b1"]
    w2, b2 = kparams["w2"], kparams["b2"]
    w3, b3 = kparams["w3"], kparams["b3"]
    w4, b4 = kparams["w4"], kparams["b4"]
    latent_dim = w2.shape[1]

    if block_b is None or block_b >= B:
        block_b = B
    grid = (pl.cdiv(B, block_b),)

    # Weights/biases are tiny (~200 KiB total); constant index_map keeps them
    # resident in VMEM for every grid step (no re-DMA on unchanged indices).
    def full(arr):
        return pl.BlockSpec(arr.shape, lambda i: (0, 0))

    flops = 2 * B * (input_dim * _HIDDEN + _HIDDEN * latent_dim
                     + latent_dim * _HIDDEN + _HIDDEN * input_dim)
    param_bytes = sum(int(a.size) * a.dtype.itemsize
                      for a in (w1, b1, w2, b2, w3, b3, w4, b4))
    bytes_accessed = int(x.size) * 4 + B * input_dim * 4 + param_bytes

    return pl.pallas_call(
        _autoencoder_kernel,
        out_shape=jax.ShapeDtypeStruct((B, input_dim), jnp.float32),
        grid_spec=pl.GridSpec(
            grid=grid,
            in_specs=[
                pl.BlockSpec((block_b, input_dim), lambda i: (i, 0)),
                full(w1), full(b1),
                full(w2), full(b2),
                full(w3), full(b3),
                full(w4), full(b4),
            ],
            out_specs=pl.BlockSpec((block_b, input_dim), lambda i: (i, 0)),
        ),
        compiler_params=pltpu.CompilerParams(
            dimension_semantics=("parallel",)),
        cost_estimate=pl.CostEstimate(
            flops=flops, transcendentals=0, bytes_accessed=bytes_accessed),
    )(x, w1, b1, w2, b2, w3, b3, w4, b4)


def init_params(key, input_dim, latent_dim, hidden=_HIDDEN):
    """Deterministic init mimicking PyTorch nn.Linear (uniform +/-1/sqrt(fan_in)).

    Weights stored as (in_features, out_features); biases as (1, out_features)."""
    keys = jax.random.split(key, 8)

    def linear(kw, kb, fan_in, fan_out):
        bound = 1.0 / float(fan_in) ** 0.5
        w = jax.random.uniform(kw, (fan_in, fan_out), jnp.float32, -bound, bound)
        b = jax.random.uniform(kb, (1, fan_out), jnp.float32, -bound, bound)
        return w, b

    w1, b1 = linear(keys[0], keys[1], input_dim, hidden)
    w2, b2 = linear(keys[2], keys[3], hidden, latent_dim)
    w3, b3 = linear(keys[4], keys[5], latent_dim, hidden)
    w4, b4 = linear(keys[6], keys[7], hidden, input_dim)
    return {"w1": w1, "b1": b1, "w2": w2, "b2": b2,
            "w3": w3, "b3": b3, "w4": w4, "b4": b4}


def prepare_params(params):
    """One-time conversion to kernel-ready params (hoisted out of the forward):
    weights -> bf16 (MXU input dtype), biases -> f32 (accumulator dtype)."""
    out = {}
    for i in (1, 2, 3, 4):
        out[f"w{i}"] = params[f"w{i}"].astype(jnp.bfloat16)
        out[f"b{i}"] = params[f"b{i}"].astype(jnp.float32)
    return out


def reference_forward(x, p):
    """Plain-JAX reference using the same bf16-matmul / f32-accumulate recipe."""
    def layer(h, w, b, relu):
        y = jnp.dot(h.astype(jnp.bfloat16), w.astype(jnp.bfloat16),
                    preferred_element_type=jnp.float32) + b.astype(jnp.float32)
        return jnp.maximum(y, 0.0) if relu else y

    h1 = layer(x, p["w1"], p["b1"], True)
    z = layer(h1, p["w2"], p["b2"], True)
    h2 = layer(z, p["w3"], p["b3"], True)
    return layer(h2, p["w4"], p["b4"], False)


if __name__ == "__main__":
    key = jax.random.PRNGKey(0)
    k_param, k_x = jax.random.split(key)

    batch = 64
    input_dim = 64
    latent_dim = 32

    params = init_params(k_param, input_dim, latent_dim)
    kparams = prepare_params(params)          # one-time pad-free bf16 cast
    x = jax.random.normal(k_x, (batch, input_dim), dtype=jnp.float32)

    # 2-step parallel grid (v7x-friendly); on single-TC v5e/v6e use block_b=None.
    out = autoencoder_forward(x, kparams, block_b=batch // 2)
    out = jax.block_until_ready(out)

    ref = reference_forward(x, params)
    assert out.shape == (batch, input_dim)
    assert jnp.allclose(out, ref, atol=2e-2, rtol=2e-2), "mismatch vs reference"

    print("KERNEL_OK")
</pallas_src>

<mosaic_0001>
module attributes {stable_mosaic.version = 11 : i64} {
  func.func @_autoencoder_kernel(%arg0: i32, %arg1: memref<32x64xf32, #tpu.memory_space<vmem>>, %arg2: memref<64x256xbf16, #tpu.memory_space<vmem>>, %arg3: memref<1x256xf32, #tpu.memory_space<vmem>>, %arg4: memref<256x32xbf16, #tpu.memory_space<vmem>>, %arg5: memref<1x32xf32, #tpu.memory_space<vmem>>, %arg6: memref<32x256xbf16, #tpu.memory_space<vmem>>, %arg7: memref<1x256xf32, #tpu.memory_space<vmem>>, %arg8: memref<256x64xbf16, #tpu.memory_space<vmem>>, %arg9: memref<1x64xf32, #tpu.memory_space<vmem>>, %arg10: memref<32x64xf32, #tpu.memory_space<vmem>>) attributes {dimension_semantics = [#tpu.dimension_semantics<parallel>], iteration_bounds = array<i64: 2>, scalar_prefetch = 0 : i64, scratch_operands = 0 : i64, tpu.core_type = #tpu.core_type<tc>, window_params = [{transform_indices = @transform_0, window_bounds = array<i64: 32, 64>}, {pipeline_mode = #tpu.pipeline_mode<synchronous>, transform_indices = @transform_1, window_bounds = array<i64: 64, 256>}, {pipeline_mode = #tpu.pipeline_mode<synchronous>, transform_indices = @transform_2, window_bounds = array<i64: 1, 256>}, {pipeline_mode = #tpu.pipeline_mode<synchronous>, transform_indices = @transform_3, window_bounds = array<i64: 256, 32>}, {pipeline_mode = #tpu.pipeline_mode<synchronous>, transform_indices = @transform_4, window_bounds = array<i64: 1, 32>}, {pipeline_mode = #tpu.pipeline_mode<synchronous>, transform_indices = @transform_5, window_bounds = array<i64: 32, 256>}, {pipeline_mode = #tpu.pipeline_mode<synchronous>, transform_indices = @transform_6, window_bounds = array<i64: 1, 256>}, {pipeline_mode = #tpu.pipeline_mode<synchronous>, transform_indices = @transform_7, window_bounds = array<i64: 256, 64>}, {pipeline_mode = #tpu.pipeline_mode<synchronous>, transform_indices = @transform_8, window_bounds = array<i64: 1, 64>}, {transform_indices = @transform_9, window_bounds = array<i64: 32, 64>}]} {
    %c0 = arith.constant 0 : index
    %c0_0 = arith.constant 0 : index
    %0 = vector.load %arg1[%c0, %c0_0] : memref<32x64xf32, #tpu.memory_space<vmem>>, vector<32x64xf32>
    %1 = arith.truncf %0 : vector<32x64xf32> to vector<32x64xbf16>
    %c0_1 = arith.constant 0 : index
    %c0_2 = arith.constant 0 : index
    %2 = vector.load %arg2[%c0_1, %c0_2] : memref<64x256xbf16, #tpu.memory_space<vmem>>, vector<64x256xbf16>
    %cst = arith.constant dense<0.000000e+00> : vector<32x256xf32>
    %3 = tpu.matmul %1, %2, %cst {dimension_numbers = #tpu.dot_dimension_numbers<[1], [0], [0], [1], [0, 0, 1, 1], [], []>} : vector<32x64xbf16>, vector<64x256xbf16>, vector<32x256xf32> -> vector<32x256xf32>
    %c0_3 = arith.constant 0 : index
    %c0_4 = arith.constant 0 : index
    %4 = vector.load %arg3[%c0_3, %c0_4] : memref<1x256xf32, #tpu.memory_space<vmem>>, vector<1x256xf32>
    %5 = vector.broadcast %4 : vector<1x256xf32> to vector<32x256xf32>
    %6 = arith.addf %3, %5 : vector<32x256xf32>
    %cst_5 = arith.constant 0.000000e+00 : f32
    %7 = vector.broadcast %cst_5 : f32 to vector<32x256xf32>
    %8 = arith.maximumf %6, %7 : vector<32x256xf32>
    %9 = arith.truncf %8 : vector<32x256xf32> to vector<32x256xbf16>
    %c0_6 = arith.constant 0 : index
    %c0_7 = arith.constant 0 : index
    %10 = vector.load %arg4[%c0_6, %c0_7] : memref<256x32xbf16, #tpu.memory_space<vmem>>, vector<256x32xbf16>
    %cst_8 = arith.constant dense<0.000000e+00> : vector<32x32xf32>
    %11 = tpu.matmul %9, %10, %cst_8 {dimension_numbers = #tpu.dot_dimension_numbers<[1], [0], [0], [1], [0, 0, 1, 1], [], []>} : vector<32x256xbf16>, vector<256x32xbf16>, vector<32x32xf32> -> vector<32x32xf32>
    %c0_9 = arith.constant 0 : index
    %c0_10 = arith.constant 0 : index
    %12 = vector.load %arg5[%c0_9, %c0_10] : memref<1x32xf32, #tpu.memory_space<vmem>>, vector<1x32xf32>
    %13 = vector.broadcast %12 : vector<1x32xf32> to vector<32x32xf32>
    %14 = arith.addf %11, %13 : vector<32x32xf32>
    %cst_11 = arith.constant 0.000000e+00 : f32
    %15 = vector.broadcast %cst_11 : f32 to vector<32x32xf32>
    %16 = arith.maximumf %14, %15 : vector<32x32xf32>
    %17 = arith.truncf %16 : vector<32x32xf32> to vector<32x32xbf16>
    %c0_12 = arith.constant 0 : index
    %c0_13 = arith.constant 0 : index
    %18 = vector.load %arg6[%c0_12, %c0_13] : memref<32x256xbf16, #tpu.memory_space<vmem>>, vector<32x256xbf16>
    %cst_14 = arith.constant dense<0.000000e+00> : vector<32x256xf32>
    %19 = tpu.matmul %17, %18, %cst_14 {dimension_numbers = #tpu.dot_dimension_numbers<[1], [0], [0], [1], [0, 0, 1, 1], [], []>} : vector<32x32xbf16>, vector<32x256xbf16>, vector<32x256xf32> -> vector<32x256xf32>
    %c0_15 = arith.constant 0 : index
    %c0_16 = arith.constant 0 : index
    %20 = vector.load %arg7[%c0_15, %c0_16] : memref<1x256xf32, #tpu.memory_space<vmem>>, vector<1x256xf32>
    %21 = vector.broadcast %20 : vector<1x256xf32> to vector<32x256xf32>
    %22 = arith.addf %19, %21 : vector<32x256xf32>
    %cst_17 = arith.constant 0.000000e+00 : f32
    %23 = vector.broadcast %cst_17 : f32 to vector<32x256xf32>
    %24 = arith.maximumf %22, %23 : vector<32x256xf32>
    %25 = arith.truncf %24 : vector<32x256xf32> to vector<32x256xbf16>
    %c0_18 = arith.constant 0 : index
    %c0_19 = arith.constant 0 : index
    %26 = vector.load %arg8[%c0_18, %c0_19] : memref<256x64xbf16, #tpu.memory_space<vmem>>, vector<256x64xbf16>
    %cst_20 = arith.constant dense<0.000000e+00> : vector<32x64xf32>
    %27 = tpu.matmul %25, %26, %cst_20 {dimension_numbers = #tpu.dot_dimension_numbers<[1], [0], [0], [1], [0, 0, 1, 1], [], []>} : vector<32x256xbf16>, vector<256x64xbf16>, vector<32x64xf32> -> vector<32x64xf32>
    %c0_21 = arith.constant 0 : index
    %c0_22 = arith.constant 0 : index
    %28 = vector.load %arg9[%c0_21, %c0_22] : memref<1x64xf32, #tpu.memory_space<vmem>>, vector<1x64xf32>
    %29 = vector.broadcast %28 : vector<1x64xf32> to vector<32x64xf32>
    %30 = arith.addf %27, %29 : vector<32x64xf32>
    %c0_23 = arith.constant 0 : index
    %c0_24 = arith.constant 0 : index
    %31 = vector.load %arg10[%c0_23, %c0_24] : memref<32x64xf32, #tpu.memory_space<vmem>>, vector<32x64xf32>
    tpu.vector_store %arg10[%c0_23, %c0_24], %30 {strides = array<i32>} : memref<32x64xf32, #tpu.memory_space<vmem>>, vector<32x64xf32>,
    return
  }
  func.func @transform_0(%arg0: i32) -> (i32, i32) {
    %c0_i32 = arith.constant 0 : i32
    %c0_i32_0 = arith.constant 0 : i32
    return %arg0, %c0_i32 : i32, i32
  }
  func.func @transform_1(%arg0: i32) -> (i32, i32) {
    %c0_i32 = arith.constant 0 : i32
    %c0_i32_0 = arith.constant 0 : i32
    %c0_i32_1 = arith.constant 0 : i32
    return %c0_i32, %c0_i32_0 : i32, i32
  }
  func.func @transform_2(%arg0: i32) -> (i32, i32) {
    %c0_i32 = arith.constant 0 : i32
    %c0_i32_0 = arith.constant 0 : i32
    %c0_i32_1 = arith.constant 0 : i32
    return %c0_i32, %c0_i32_0 : i32, i32
  }
  func.func @transform_3(%arg0: i32) -> (i32, i32) {
    %c0_i32 = arith.constant 0 : i32
    %c0_i32_0 = arith.constant 0 : i32
    %c0_i32_1 = arith.constant 0 : i32
    return %c0_i32, %c0_i32_0 : i32, i32
  }
  func.func @transform_4(%arg0: i32) -> (i32, i32) {
    %c0_i32 = arith.constant 0 : i32
    %c0_i32_0 = arith.constant 0 : i32
    %c0_i32_1 = arith.constant 0 : i32
    return %c0_i32, %c0_i32_0 : i32, i32
  }
  func.func @transform_5(%arg0: i32) -> (i32, i32) {
    %c0_i32 = arith.constant 0 : i32
    %c0_i32_0 = arith.constant 0 : i32
    %c0_i32_1 = arith.constant 0 : i32
    return %c0_i32, %c0_i32_0 : i32, i32
  }
  func.func @transform_6(%arg0: i32) -> (i32, i32) {
    %c0_i32 = arith.constant 0 : i32
    %c0_i32_0 = arith.constant 0 : i32
    %c0_i32_1 = arith.constant 0 : i32
    return %c0_i32, %c0_i32_0 : i32, i32
  }
  func.func @transform_7(%arg0: i32) -> (i32, i32) {
    %c0_i32 = arith.constant 0 : i32
    %c0_i32_0 = arith.constant 0 : i32
    %c0_i32_1 = arith.constant 0 : i32
    return %c0_i32, %c0_i32_0 : i32, i32
  }
  func.func @transform_8(%arg0: i32) -> (i32, i32) {
    %c0_i32 = arith.constant 0 : i32
    %c0_i32_0 = arith.constant 0 : i32
    %c0_i32_1 = arith.constant 0 : i32
    return %c0_i32, %c0_i32_0 : i32, i32
  }
  func.func @transform_9(%arg0: i32) -> (i32, i32) {
    %c0_i32 = arith.constant 0 : i32
    %c0_i32_0 = arith.constant 0 : i32
    return %arg0, %c0_i32 : i32, i32
  }
}

</mosaic_0001>

<llo_original>
// kernel: autoencoder_forward.1
$region0: #{autoencoder_forward.1}
  #allocation0 [shape = 'u32[]', space=smem, size = 0x4, offset = 0x4, fixed_abs, tag = 'smem constant byte address 0x4 - core index']
  #allocation1 [shape = 'u32[144,128]{1,0:T(1,128)}', space=vmem, size = 0x12000, scoped, tag = 'internal scratch']
  %s0 = inlined_call_operand.vmem [shape: f32[64,64], index: 0, kind: input, shape index: {}]
  %s1 = inlined_call_operand.vmem [shape: bf16[64,256], index: 1, kind: input, shape index: {}]
  %s2 = inlined_call_operand.vmem [shape: f32[1,256], index: 2, kind: input, shape index: {}]
  %s3 = inlined_call_operand.vmem [shape: bf16[256,32], index: 3, kind: input, shape index: {}]
  %s4 = inlined_call_operand.vmem [shape: f32[1,32], index: 4, kind: input, shape index: {}]
  %s5 = inlined_call_operand.vmem [shape: bf16[32,256], index: 5, kind: input, shape index: {}]
  %s6 = inlined_call_operand.vmem [shape: f32[1,256], index: 6, kind: input, shape index: {}]
  %s7 = inlined_call_operand.vmem [shape: bf16[256,64], index: 7, kind: input, shape index: {}]
  %s8 = inlined_call_operand.vmem [shape: f32[1,64], index: 8, kind: input, shape index: {}]
  %s9 = inlined_call_operand.hbm [shape: f32[64,64], index: 9, kind: output, shape index: {}]
  %s10 = sld [smem:[#allocation0]]
  $region69: #{autoencoder_forward.1} parent=0
    _
  %s12 = ssub.s32 1, %s10
  %s13 = scalar_select 0, %s12, %s10
  $region1: #{autoencoder_forward.1} parent=0
    #allocation2 [shape = 'u8[32768]{0}', space=vmem, size = 0x8000, scoped, tag = 'output window, operand 0']
    #allocation3 [shape = 's32[2]{0}', space=sflag, size = 0x8, scoped, tag = 'scoped memory for autoencoder_forward.1']
    %14 = vsyncpa [#allocation3], 0
    %s15 = scalar_lea.sflag [#allocation3], 1
    %16 = vsyncpa %s15, 0
    loop: start=0, step=1, limit=4
    $region2: #{autoencoder_forward.1} parent=1 // loop_pre_header
      _
    $region3: #{autoencoder_forward.1} parent=1 // loop_header
      %s18 = sphi 0, %s22
      %p19 = scmp.ge.s32.totalorder %s18, 4
      %s28 = sphi 0, %s30
      %s31 = sphi 0, %s28
      %s32 = sphi 0, %s31
      %s48 = sphi 0, %s32
      %s52 = sphi 0, %s52
      %s54 = sphi 0, %s52
      %s55 = sphi 0, %s54
      %s69 = sphi 0, %s55
      %s73 = sphi 0, %s73
      %s75 = sphi 0, %s73
      %s76 = sphi 0, %s75
      %s90 = sphi 0, %s76
      %s94 = sphi 0, %s94
      %s96 = sphi 0, %s94
      %s97 = sphi 0, %s96
      %s111 = sphi 0, %s97
      %s115 = sphi 0, %s115
      %s117 = sphi 0, %s115
      %s118 = sphi 0, %s117
      %s132 = sphi 0, %s118
      %s136 = sphi 0, %s136
      %s138 = sphi 0, %s136
      %s139 = sphi 0, %s138
      %s153 = sphi 0, %s139
      %s157 = sphi 0, %s157
      %s159 = sphi 0, %s157
      %s160 = sphi 0, %s159
      %s174 = sphi 0, %s160
      %s178 = sphi 0, %s178
      %s180 = sphi 0, %s178
      %s181 = sphi 0, %s180
      %s195 = sphi 0, %s181
      %s199 = sphi 0, %s199
      %s201 = sphi 0, %s199
      %s202 = sphi 0, %s201
      %s216 = sphi 0, %s202
      %s222 = sphi 0, %s224
      %s225 = sphi 0, %s222
      %s226 = sphi 0, %s225
      %s242 = sphi 0, %s226
    $region4: #{autoencoder_forward.1} parent=1 // loop_header_branch
      %21 = sbr.rel (%p19) target = $region8
    $region5: #{autoencoder_forward.1} parent=1 // loop_body
      %s23 = ssub.s32 %s18, 1
      %s24 = ssub.s32 %s18, 2
      %s25 = sadd.s32 %s18, 1
      %s26 = ssub.s32 %s18, %s25
      %p27 = scmp.eq.s32.totalorder %s26, 0
      %s29 = sadd.s32 %s28, 1
      %s30 = scalar_select %p27, %s28, %s29
      %p33 = pneg %p27
      %p34 = scmp.eq.s32.totalorder %s18, 1
      %p35 = por %p33, %p34
      %p36 = scmp.ne.s32.totalorder %s28, %s31
      %p37 = scmp.eq.s32.totalorder %s18, 0
      %p38 = por %p36, %p37
      %p39 = scmp.ne.s32.totalorder %s28, %s31
      %p40 = scmp.eq.s32.totalorder %s23, 1
      %p41 = por %p39, %p40
      %p42 = scmp.ne.s32.totalorder %s31, %s32
      %p43 = scmp.eq.s32.totalorder %s23, 0
      %p44 = por %p42, %p43
      %p45 = scmp.ne.s32.totalorder %s31, %s32
      %p46 = scmp.eq.s32.totalorder %s24, 1
      %p47 = por %p45, %p46
      %p49 = scmp.ne.s32.totalorder %s32, %s48
      %p50 = scmp.eq.s32.totalorder %s24, 0
      %p51 = por %p49, %p50
      %s53 = sadd.s32 %s52, 1
      %p56 = scmp.eq.s32.totalorder %s18, 1
      %p57 = scmp.ne.s32.totalorder %s52, %s54
      %p58 = scmp.eq.s32.totalorder %s18, 0
      %p59 = por %p57, %p58
      %p60 = scmp.ne.s32.totalorder %s52, %s54
      %p61 = scmp.eq.s32.totalorder %s23, 1
      %p62 = por %p60, %p61
      %p63 = scmp.ne.s32.totalorder %s54, %s55
      %p64 = scmp.eq.s32.totalorder %s23, 0
      %p65 = por %p63, %p64
      %p66 = scmp.ne.s32.totalorder %s54, %s55
      %p67 = scmp.eq.s32.totalorder %s24, 1
      %p68 = por %p66, %p67
      %p70 = scmp.ne.s32.totalorder %s55, %s69
      %p71 = scmp.eq.s32.totalorder %s24, 0
      %p72 = por %p70, %p71
      %s74 = sadd.s32 %s73, 1
      %p77 = scmp.eq.s32.totalorder %s18, 1
      %p78 = scmp.ne.s32.totalorder %s73, %s75
      %p79 = scmp.eq.s32.totalorder %s18, 0
      %p80 = por %p78, %p79
      %p81 = scmp.ne.s32.totalorder %s73, %s75
      %p82 = scmp.eq.s32.totalorder %s23, 1
      %p83 = por %p81, %p82
      %p84 = scmp.ne.s32.totalorder %s75, %s76
      %p85 = scmp.eq.s32.totalorder %s23, 0
      %p86 = por %p84, %p85
      %p87 = scmp.ne.s32.totalorder %s75, %s76
      %p88 = scmp.eq.s32.totalorder %s24, 1
      %p89 = por %p87, %p88
      %p91 = scmp.ne.s32.totalorder %s76, %s90
      %p92 = scmp.eq.s32.totalorder %s24, 0
      %p93 = por %p91, %p92
      %s95 = sadd.s32 %s94, 1
      %p98 = scmp.eq.s32.totalorder %s18, 1
      %p99 = scmp.ne.s32.totalorder %s94, %s96
      %p100 = scmp.eq.s32.totalorder %s18, 0
      %p101 = por %p99, %p100
      %p102 = scmp.ne.s32.totalorder %s94, %s96
      %p103 = scmp.eq.s32.totalorder %s23, 1
      %p104 = por %p102, %p103
      %p105 = scmp.ne.s32.totalorder %s96, %s97
      %p106 = scmp.eq.s32.totalorder %s23, 0
      %p107 = por %p105, %p106
      %p108 = scmp.ne.s32.totalorder %s96, %s97
      %p109 = scmp.eq.s32.totalorder %s24, 1
      %p110 = por %p108, %p109
      %p112 = scmp.ne.s32.totalorder %s97, %s111
      %p113 = scmp.eq.s32.totalorder %s24, 0
      %p114 = por %p112, %p113
      %s116 = sadd.s32 %s115, 1
      %p119 = scmp.eq.s32.totalorder %s18, 1
      %p120 = scmp.ne.s32.totalorder %s115, %s117
      %p121 = scmp.eq.s32.totalorder %s18, 0
      %p122 = por %p120, %p121
      %p123 = scmp.ne.s32.totalorder %s115, %s117
      %p124 = scmp.eq.s32.totalorder %s23, 1
      %p125 = por %p123, %p124
      %p126 = scmp.ne.s32.totalorder %s117, %s118
      %p127 = scmp.eq.s32.totalorder %s23, 0
      %p128 = por %p126, %p127
      %p129 = scmp.ne.s32.totalorder %s117, %s118
      %p130 = scmp.eq.s32.totalorder %s24, 1
      %p131 = por %p129, %p130
      %p133 = scmp.ne.s32.totalorder %s118, %s132
      %p134 = scmp.eq.s32.totalorder %s24, 0
      %p135 = por %p133, %p134
      %s137 = sadd.s32 %s136, 1
      %p140 = scmp.eq.s32.totalorder %s18, 1
      %p141 = scmp.ne.s32.totalorder %s136, %s138
      %p142 = scmp.eq.s32.totalorder %s18, 0
      %p143 = por %p141, %p142
      %p144 = scmp.ne.s32.totalorder %s136, %s138
      %p145 = scmp.eq.s32.totalorder %s23, 1
      %p146 = por %p144, %p145
      %p147 = scmp.ne.s32.totalorder %s138, %s139
      %p148 = scmp.eq.s32.totalorder %s23, 0
      %p149 = por %p147, %p148
      %p150 = scmp.ne.s32.totalorder %s138, %s139
      %p151 = scmp.eq.s32.totalorder %s24, 1
      %p152 = por %p150, %p151
      %p154 = scmp.ne.s32.totalorder %s139, %s153
      %p155 = scmp.eq.s32.totalorder %s24, 0
      %p156 = por %p154, %p155
      %s158 = sadd.s32 %s157, 1
      %p161 = scmp.eq.s32.totalorder %s18, 1
      %p162 = scmp.ne.s32.totalorder %s157, %s159
      %p163 = scmp.eq.s32.totalorder %s18, 0
      %p164 = por %p162, %p163
      %p165 = scmp.ne.s32.totalorder %s157, %s159
      %p166 = scmp.eq.s32.totalorder %s23, 1
      %p167 = por %p165, %p166
      %p168 = scmp.ne.s32.totalorder %s159, %s160
      %p169 = scmp.eq.s32.totalorder %s23, 0
      %p170 = por %p168, %p169
      %p171 = scmp.ne.s32.totalorder %s159, %s160
      %p172 = scmp.eq.s32.totalorder %s24, 1
      %p173 = por %p171, %p172
      %p175 = scmp.ne.s32.totalorder %s160, %s174
      %p176 = scmp.eq.s32.totalorder %s24, 0
      %p177 = por %p175, %p176
      %s179 = sadd.s32 %s178, 1
      %p182 = scmp.eq.s32.totalorder %s18, 1
      %p183 = scmp.ne.s32.totalorder %s178, %s180
      %p184 = scmp.eq.s32.totalorder %s18, 0
      %p185 = por %p183, %p184
      %p186 = scmp.ne.s32.totalorder %s178, %s180
      %p187 = scmp.eq.s32.totalorder %s23, 1
      %p188 = por %p186, %p187
      %p189 = scmp.ne.s32.totalorder %s180, %s181
      %p190 = scmp.eq.s32.totalorder %s23, 0
      %p191 = por %p189, %p190
      %p192 = scmp.ne.s32.totalorder %s180, %s181
      %p193 = scmp.eq.s32.totalorder %s24, 1
      %p194 = por %p192, %p193
      %p196 = scmp.ne.s32.totalorder %s181, %s195
      %p197 = scmp.eq.s32.totalorder %s24, 0
      %p198 = por %p196, %p197
      %s200 = sadd.s32 %s199, 1
      %p203 = scmp.eq.s32.totalorder %s18, 1
      %p204 = scmp.ne.s32.totalorder %s199, %s201
      %p205 = scmp.eq.s32.totalorder %s18, 0
      %p206 = por %p204, %p205
      %p207 = scmp.ne.s32.totalorder %s199, %s201
      %p208 = scmp.eq.s32.totalorder %s23, 1
      %p209 = por %p207, %p208
      %p210 = scmp.ne.s32.totalorder %s201, %s202
      %p211 = scmp.eq.s32.totalorder %s23, 0
      %p212 = por %p210, %p211
      %p213 = scmp.ne.s32.totalorder %s201, %s202
      %p214 = scmp.eq.s32.totalorder %s24, 1
      %p215 = por %p213, %p214
      %p217 = scmp.ne.s32.totalorder %s202, %s216
      %p218 = scmp.eq.s32.totalorder %s24, 0
      %p219 = por %p217, %p218
      %s220 = ssub.s32 %s18, %s25
      %p221 = scmp.eq.s32.totalorder %s220, 0
      %s223 = sadd.s32 %s222, 1
      %s224 = scalar_select %p221, %s222, %s223
      %p227 = pneg %p221
      %p228 = scmp.eq.s32.totalorder %s18, 1
      %p229 = por %p227, %p228
      %p230 = scmp.ne.s32.totalorder %s222, %s225
      %p231 = scmp.eq.s32.totalorder %s18, 0
      %p232 = por %p230, %p231
      %p233 = scmp.ne.s32.totalorder %s222, %s225
      %p234 = scmp.eq.s32.totalorder %s23, 1
      %p235 = por %p233, %p234
      %p236 = scmp.ne.s32.totalorder %s225, %s226
      %p237 = scmp.eq.s32.totalorder %s23, 0
      %p238 = por %p236, %p237
      %p239 = scmp.ne.s32.totalorder %s225, %s226
      %p240 = scmp.eq.s32.totalorder %s24, 1
      %p241 = por %p239, %p240
      %p243 = scmp.ne.s32.totalorder %s226, %s242
      %p244 = scmp.eq.s32.totalorder %s24, 0
      %p245 = por %p243, %p244
      %p246 = scmp.le.s32.totalorder 1, %s18
      %p247 = scmp.lt.s32.totalorder %s18, 3
      %p248 = pnand %p246, %p247
      %p249 = pneg %p248
      // Predicated region
      $region9: #{autoencoder_forward.1} parent=5 // pred_check
        _
      $region10: #{autoencoder_forward.1} parent=5 // pred_check_branch
        %251 = sbr.rel (%p248) target = $region12
      $region11: #{autoencoder_forward.1} parent=5 // pred_region
        %s252 = ssub.s32 %s18, 1
        // Predicated region
        $region13: #{autoencoder_forward.1} parent=11 // pred_check
          %p253 = pneg %p65
        $region14: #{autoencoder_forward.1} parent=11 // pred_check_branch
          %255 = sbr.rel (%p253) target = $region16
        $region15: #{autoencoder_forward.1} parent=11 // pred_region
          _
        $region16: #{autoencoder_forward.1} parent=11 // pred_fallthru
          _
        // Predicated region
        $region17: #{autoencoder_forward.1} parent=11 // pred_check
          %p256 = pneg %p86
        $region18: #{autoencoder_forward.1} parent=11 // pred_check_branch
          %258 = sbr.rel (%p256) target = $region20
        $region19: #{autoencoder_forward.1} parent=11 // pred_region
          _
        $region20: #{autoencoder_forward.1} parent=11 // pred_fallthru
          _
        // Predicated region
        $region21: #{autoencoder_forward.1} parent=11 // pred_check
          %p259 = pneg %p107
        $region22: #{autoencoder_forward.1} parent=11 // pred_check_branch
          %261 = sbr.rel (%p259) target = $region24
        $region23: #{autoencoder_forward.1} parent=11 // pred_region
          _
        $region24: #{autoencoder_forward.1} parent=11 // pred_fallthru
          _
        // Predicated region
        $region25: #{autoencoder_forward.1} parent=11 // pred_check
          %p262 = pneg %p128
        $region26: #{autoencoder_forward.1} parent=11 // pred_check_branch
          %264 = sbr.rel (%p262) target = $region28
        $region27: #{autoencoder_forward.1} parent=11 // pred_region
          _
        $region28: #{autoencoder_forward.1} parent=11 // pred_fallthru
          _
        // Predicated region
        $region29: #{autoencoder_forward.1} parent=11 // pred_check
          %p265 = pneg %p149
        $region30: #{autoencoder_forward.1} parent=11 // pred_check_branch
          %267 = sbr.rel (%p265) target = $region32
        $region31: #{autoencoder_forward.1} parent=11 // pred_region
          _
        $region32: #{autoencoder_forward.1} parent=11 // pred_fallthru
          _
        // Predicated region
        $region33: #{autoencoder_forward.1} parent=11 // pred_check
          %p268 = pneg %p170
        $region34: #{autoencoder_forward.1} parent=11 // pred_check_branch
          %270 = sbr.rel (%p268) target = $region36
        $region35: #{autoencoder_forward.1} parent=11 // pred_region
          _
        $region36: #{autoencoder_forward.1} parent=11 // pred_fallthru
          _
        // Predicated region
        $region37: #{autoencoder_forward.1} parent=11 // pred_check
          %p271 = pneg %p191
        $region38: #{autoencoder_forward.1} parent=11 // pred_check_branch
          %273 = sbr.rel (%p271) target = $region40
        $region39: #{autoencoder_forward.1} parent=11 // pred_region
          _
        $region40: #{autoencoder_forward.1} parent=11 // pred_fallthru
          _
        // Predicated region
        $region41: #{autoencoder_forward.1} parent=11 // pred_check
          %p274 = pneg %p212
        $region42: #{autoencoder_forward.1} parent=11 // pred_check_branch
          %276 = sbr.rel (%p274) target = $region44
        $region43: #{autoencoder_forward.1} parent=11 // pred_region
          _
        $region44: #{autoencoder_forward.1} parent=11 // pred_fallthru
          _
      $region12: #{autoencoder_forward.1} parent=5 // pred_fallthru
        _
      %p277 = scmp.lt.s32.totalorder %s18, 2
      // Predicated region
      $region45: #{autoencoder_forward.1} parent=5 // pred_check
        %p278 = pneg %p277
      $region46: #{autoencoder_forward.1} parent=5 // pred_check_branch
        %280 = sbr.rel (%p278) target = $region48
      $region47: #{autoencoder_forward.1} parent=5 // pred_region
        // Predicated region
        $region49: #{autoencoder_forward.1} parent=47 // pred_check
          %p281 = pneg %p38
        $region50: #{autoencoder_forward.1} parent=47 // pred_check_branch
          %283 = sbr.rel (%p281) target = $region52
        $region51: #{autoencoder_forward.1} parent=47 // pred_region
          %s284 = smul.u32 4, %s18
          %p285 = scmp.lt.s32.totalorder %s284, 7
          %s286 = scalar_select %p285, %s284, 7
          %s287 = smul.addr %s286, 8
          %s288 = scalar_lea.vmem %s0, %s287
          %s289 = smul.u32 4, %s18
        $region52: #{autoencoder_forward.1} parent=47 // pred_fallthru
          _
      $region48: #{autoencoder_forward.1} parent=5 // pred_fallthru
        _
      %p290 = scmp.le.s32.totalorder 1, %s18
      %p291 = scmp.lt.s32.totalorder %s18, 3
      %p292 = pnand %p290, %p291
      %p293 = pneg %p292
      // Predicated region
      $region53: #{autoencoder_forward.1} parent=5 // pred_check
        _
      $region54: #{autoencoder_forward.1} parent=5 // pred_check_branch
        %295 = sbr.rel (%p292) target = $region56
      $region55: #{autoencoder_forward.1} parent=5 // pred_region
        %s296 = ssub.s32 %s18, 1
        %s297 = smul.u32 4, %s23
        %p298 = scmp.lt.s32.totalorder %s297, 7
        %s299 = scalar_select %p298, %s297, 7
        %s300 = smul.addr %s299, 8
        %s301 = scalar_lea.vmem %s0, %s300
        %p302 = pneg %p44
        %p303 = pneg %p41
        %p304 = pneg %p65
        %p305 = pneg %p62
        %p306 = pneg %p86
        %p307 = pneg %p83
        %p308 = pneg %p107
        %p309 = pneg %p104
        %p310 = pneg %p128
        %p311 = pneg %p125
        %p312 = pneg %p149
        %p313 = pneg %p146
        %p314 = pneg %p170
        %p315 = pneg %p167
        %p316 = pneg %p191
        %p317 = pneg %p188
        %p318 = pneg %p212
        %p319 = pneg %p209
        %p320 = pneg %p238
        %p321 = pneg %p235
        %s322 = sand.u32 %s225, 1
        %s323 = scalar_lea.sflag [#allocation3], %s322
        %s324 = sand.u32 %s225, 1
        %s325 = smul.addr %s324, 32
        %s326 = scalar_lea.vmem [#allocation2], %s325
        %s327 = smul.u32 4, %s23
        %p328 = scmp.lt.s32.totalorder %s327, 7
        %s329 = scalar_select %p328, %s327, 7
        %s330 = smul.addr %s329, 8
        %s331 = scalar_lea.vmem %s0, %s330
        %s332 = smul.u32 4, %s23
        %s333 = smul.u32 4, %s23
        %v335 = vld [vmem:[%s331] sm:$0xff]
        %v336 = vld [vmem:[%s331 + $0x8] sm:$0xff]
        %v337 = vld [vmem:[%s331 + $0x10] sm:$0xff]
        %v338 = vld [vmem:[%s331 + $0x18] sm:$0xff]
        %v339 = vpack.c.bf16 %v336, %v335
        %v340 = vpack.c.bf16 %v338, %v337
        %v341 = vld [vmem:[%s1] sm:$0xff]
        %v342 = vld [vmem:[%s1 + $0x8] sm:$0xff]
        %v343 = vld [vmem:[%s1 + $0x10] sm:$0xff]
        %v344 = vld [vmem:[%s1 + $0x18] sm:$0xff]
        %v345 = vld [vmem:[%s1 + $0x20] sm:$0xff]
        %v346 = vld [vmem:[%s1 + $0x28] sm:$0xff]
        %v347 = vld [vmem:[%s1 + $0x30] sm:$0xff]
        %v348 = vld [vmem:[%s1 + $0x38] sm:$0xff]
        %v349 = vld [vmem:[%s2] sm:$0x3]
        %v351 = vlaneseq
        %v352 = vshrl.u32 %v351, 7
        %v353 = vsub.s32 0, %v352
        %v354 = vrot.slane %v349, %v353
        %v355 = vlaneseq
        %v356 = vshrl.u32 %v355, 7
        %v357 = vsub.s32 1, %v356
        %v358 = vrot.slane %v349, %v357
        %v369 = vunpack.c.l.b16 %v341
        %v370 = vunpack.c.h.b16 %v341
        %v371 = vunpack.c.l.b16 %v342
        %v372 = vunpack.c.h.b16 %v342
        %v373 = vunpack.c.l.b16 %v343
        %v374 = vunpack.c.h.b16 %v343
        %v375 = vunpack.c.l.b16 %v344
        %v376 = vunpack.c.h.b16 %v344
        %v377 = vunpack.c.l.b16 %v345
        %v378 = vunpack.c.h.b16 %v345
        %v379 = vunpack.c.l.b16 %v346
        %v380 = vunpack.c.h.b16 %v346
        %v381 = vunpack.c.l.b16 %v347
        %v382 = vunpack.c.h.b16 %v347
        %v383 = vunpack.c.l.b16 %v348
        %v384 = vunpack.c.h.b16 %v348
        %v385 = vpack.c.b16 %v371, %v369
        %v386 = vpack.c.b16 %v372, %v370
        %v387 = vpack.c.b16 %v375, %v373
        %v388 = vpack.c.b16 %v376, %v374
        %v389 = vpack.c.b16 %v379, %v377
        %v390 = vpack.c.b16 %v380, %v378
        %v391 = vpack.c.b16 %v383, %v381
        %v392 = vpack.c.b16 %v384, %v382
        %vm401 = vcmask 523264
        %v403 = vsel %vm401, %v339, 0
        %v406 = vsel %vm401, %v340, 0
        %408 = vmatprep.subr.bf16.mxu0 0
        %409 = vmatpush1.bf16.msra.mxu0 0
        %410 = vmatprep.subr.bf16.mxu0 0
        %411 = vmatpush1.bf16.msra.mxu0 0
        %412 = vmatprep.subr.bf16.mxu0 0
        %413 = vmatpush1.bf16.msra.mxu0 0
        %414 = vmatprep.subr.bf16.mxu0 0
        %415 = vmatpush1.bf16.msra.mxu0 0
        %416 = vmatprep.subr.bf16.mxu0 %v392
        %417 = vmatpush1.bf16.msra.mxu0 %v391
        %418 = vmatprep.subr.bf16.mxu0 %v390
        %419 = vmatpush1.bf16.msra.mxu0 %v389
        %420 = vmatprep.subr.bf16.mxu0 %v388
        %421 = vmatpush1.bf16.msra.mxu0 %v387
        %422 = vmatprep.subr.bf16.mxu0 %v386
        %423 = vmatpush1.bf16.msra.mxu0 %v385
        %424 = vmatprep.subr.bf16.mxu0 0
        %425 = vmatpush2.bf16.msra.mxu0 0
        %426 = vmatprep.subr.bf16.mxu0 0
        %427 = vmatpush2.bf16.msra.mxu0 0
        %428 = vmatprep.subr.bf16.mxu0 0
        %429 = vmatpush2.bf16.msra.mxu0 0
        %430 = vmatprep.subr.bf16.mxu0 0
        %431 = vmatpush2.bf16.msra.mxu0 0
        %432 = vmatprep.subr.bf16.mxu0 0
        %433 = vmatpush2.bf16.msra.mxu0 0
        %434 = vmatprep.subr.bf16.mxu0 0
        %435 = vmatpush2.bf16.msra.mxu0 0
        %436 = vmatprep.subr.bf16.mxu0 0
        %437 = vmatpush2.bf16.msra.mxu0 0
        %438 = vmatprep.subr.bf16.mxu0 0
        %439 = vmatpush2.bf16.msra.mxu0 0
        %440 = vmatprep.mubr.bf16.mxu0 0
        %441 = vmatmul.mubr.bf16.gmra.mxu0 %v403
        %v442 = vpop.f32.mrf.mxu0
        %v443 = vadd.f32 %v354, %v442
        %v444 = vpop.f32.mrf.mxu0
        %v445 = vadd.f32 %v358, %v444
        %v446 = vpop.f32.mrf.mxu0
        %v447 = vadd.f32 %v354, %v446
        %v448 = vpop.f32.mrf.mxu0
        %v449 = vadd.f32 %v358, %v448
        %450 = vmatprep.mubr.bf16.mxu0 0
        %451 = vmatmul.mubr.bf16.gmra.mxu0 %v406
        %v452 = vpop.f32.mrf.mxu0
        %v453 = vadd.f32 %v354, %v452
        %v454 = vpop.f32.mrf.mxu0
        %v455 = vadd.f32 %v358, %v454
        %v456 = vpop.f32.mrf.mxu0
        %v457 = vadd.f32 %v354, %v456
        %v458 = vpop.f32.mrf.mxu0
        %v459 = vadd.f32 %v358, %v458
        %460 = vdwg.mxu0
        %v461 = vmax.f32 %v443, 0.0
        %v462 = vmax.f32 %v445, 0.0
        %v463 = vmax.f32 %v447, 0.0
        %v464 = vmax.f32 %v449, 0.0
        %v465 = vmax.f32 %v453, 0.0
        %v466 = vmax.f32 %v455, 0.0
        %v467 = vmax.f32 %v457, 0.0
        %v468 = vmax.f32 %v459, 0.0
        %v469 = vpack.c.bf16 %v463, %v461
        %v470 = vpack.c.bf16 %v464, %v462
        %v471 = vpack.c.bf16 %v467, %v465
        %v472 = vpack.c.bf16 %v468, %v466
        %v473 = vld [vmem:[%s3] sm:$0xf]
        %v474 = vld [vmem:[%s3 + $0x4] sm:$0xf]
        %v475 = vld [vmem:[%s3 + $0x8] sm:$0xf]
        %v476 = vld [vmem:[%s3 + $0xc] sm:$0xf]
        %v477 = vld [vmem:[%s3 + $0x10] sm:$0xf]
        %v478 = vld [vmem:[%s3 + $0x14] sm:$0xf]
        %v479 = vld [vmem:[%s3 + $0x18] sm:$0xf]
        %v480 = vld [vmem:[%s3 + $0x1c] sm:$0xf]
        %v481 = vld [vmem:[%s3 + $0x20] sm:$0xf]
        %v482 = vld [vmem:[%s3 + $0x24] sm:$0xf]
        %v483 = vld [vmem:[%s3 + $0x28] sm:$0xf]
        %v484 = vld [vmem:[%s3 + $0x2c] sm:$0xf]
        %v485 = vld [vmem:[%s3 + $0x30] sm:$0xf]
        %v486 = vld [vmem:[%s3 + $0x34] sm:$0xf]
        %v487 = vld [vmem:[%s3 + $0x38] sm:$0xf]
        %v488 = vld [vmem:[%s3 + $0x3c] sm:$0xf]
        %v489 = vld [vmem:[%s3 + $0x40] sm:$0xf]
        %v490 = vld [vmem:[%s3 + $0x44] sm:$0xf]
        %v491 = vld [vmem:[%s3 + $0x48] sm:$0xf]
        %v492 = vld [vmem:[%s3 + $0x4c] sm:$0xf]
        %v493 = vld [vmem:[%s3 + $0x50] sm:$0xf]
        %v494 = vld [vmem:[%s3 + $0x54] sm:$0xf]
        %v495 = vld [vmem:[%s3 + $0x58] sm:$0xf]
        %v496 = vld [vmem:[%s3 + $0x5c] sm:$0xf]
        %v497 = vld [vmem:[%s3 + $0x60] sm:$0xf]
        %v498 = vld [vmem:[%s3 + $0x64] sm:$0xf]
        %v499 = vld [vmem:[%s3 + $0x68] sm:$0xf]
        %v500 = vld [vmem:[%s3 + $0x6c] sm:$0xf]
        %v501 = vld [vmem:[%s3 + $0x70] sm:$0xf]
        %v502 = vld [vmem:[%s3 + $0x74] sm:$0xf]
        %v503 = vld [vmem:[%s3 + $0x78] sm:$0xf]
        %v504 = vld [vmem:[%s3 + $0x7c] sm:$0xf]
        %v505 = vld [vmem:[%s4] sm:$0x1]
        %v507 = vlaneseq
        %v508 = vshrl.u32 %v507, 7
        %v509 = vsub.s32 0, %v508
        %v510 = vrot.slane %v505, %v509
        %v544 = vunpack.c.l.b16 %v473
        %v545 = vunpack.c.l.b16 %v474
        %v546 = vunpack.c.l.b16 %v475
        %v547 = vunpack.c.l.b16 %v476
        %v548 = vunpack.c.l.b16 %v477
        %v549 = vunpack.c.l.b16 %v478
        %v550 = vunpack.c.l.b16 %v479
        %v551 = vunpack.c.l.b16 %v480
        %v552 = vunpack.c.l.b16 %v481
        %v553 = vunpack.c.l.b16 %v482
        %v554 = vunpack.c.l.b16 %v483
        %v555 = vunpack.c.l.b16 %v484
        %v556 = vunpack.c.l.b16 %v485
        %v557 = vunpack.c.l.b16 %v486
        %v558 = vunpack.c.l.b16 %v487
        %v559 = vunpack.c.l.b16 %v488
        %v560 = vunpack.c.l.b16 %v489
        %v561 = vunpack.c.l.b16 %v490
        %v562 = vunpack.c.l.b16 %v491
        %v563 = vunpack.c.l.b16 %v492
        %v564 = vunpack.c.l.b16 %v493
        %v565 = vunpack.c.l.b16 %v494
        %v566 = vunpack.c.l.b16 %v495
        %v567 = vunpack.c.l.b16 %v496
        %v568 = vunpack.c.l.b16 %v497
        %v569 = vunpack.c.l.b16 %v498
        %v570 = vunpack.c.l.b16 %v499
        %v571 = vunpack.c.l.b16 %v500
        %v572 = vunpack.c.l.b16 %v501
        %v573 = vunpack.c.l.b16 %v502
        %v574 = vunpack.c.l.b16 %v503
        %v575 = vunpack.c.l.b16 %v504
        %v576 = vpack.c.b16 %v545, %v544
        %v577 = vpack.c.b16 %v547, %v546
        %v578 = vpack.c.b16 %v549, %v548
        %v579 = vpack.c.b16 %v551, %v550
        %v580 = vpack.c.b16 %v553, %v552
        %v581 = vpack.c.b16 %v555, %v554
        %v582 = vpack.c.b16 %v557, %v556
        %v583 = vpack.c.b16 %v559, %v558
        %v584 = vpack.c.b16 %v561, %v560
        %v585 = vpack.c.b16 %v563, %v562
        %v586 = vpack.c.b16 %v565, %v564
        %v587 = vpack.c.b16 %v567, %v566
        %v588 = vpack.c.b16 %v569, %v568
        %v589 = vpack.c.b16 %v571, %v570
        %v590 = vpack.c.b16 %v573, %v572
        %v591 = vpack.c.b16 %v575, %v574
        %608 = vmatprep.subr.bf16.mxu0 0
        %609 = vmatpush1.bf16.msra.mxu0 %v583
        %610 = vmatprep.subr.bf16.mxu0 0
        %611 = vmatpush1.bf16.msra.mxu0 %v582
        %612 = vmatprep.subr.bf16.mxu0 0
        %613 = vmatpush1.bf16.msra.mxu0 %v581
        %614 = vmatprep.subr.bf16.mxu0 0
        %615 = vmatpush1.bf16.msra.mxu0 %v580
        %616 = vmatprep.subr.bf16.mxu0 0
        %617 = vmatpush1.bf16.msra.mxu0 %v579
        %618 = vmatprep.subr.bf16.mxu0 0
        %619 = vmatpush1.bf16.msra.mxu0 %v578
        %620 = vmatprep.subr.bf16.mxu0 0
        %621 = vmatpush1.bf16.msra.mxu0 %v577
        %622 = vmatprep.subr.bf16.mxu0 0
        %623 = vmatpush1.bf16.msra.mxu0 %v576
        %624 = vmatprep.subr.bf16.mxu0 0
        %625 = vmatpush2.bf16.msra.mxu0 %v591
        %626 = vmatprep.subr.bf16.mxu0 0
        %627 = vmatpush2.bf16.msra.mxu0 %v590
        %628 = vmatprep.subr.bf16.mxu0 0
        %629 = vmatpush2.bf16.msra.mxu0 %v589
        %630 = vmatprep.subr.bf16.mxu0 0
        %631 = vmatpush2.bf16.msra.mxu0 %v588
        %632 = vmatprep.subr.bf16.mxu0 0
        %633 = vmatpush2.bf16.msra.mxu0 %v587
        %634 = vmatprep.subr.bf16.mxu0 0
        %635 = vmatpush2.bf16.msra.mxu0 %v586
        %636 = vmatprep.subr.bf16.mxu0 0
        %637 = vmatpush2.bf16.msra.mxu0 %v585
        %638 = vmatprep.subr.bf16.mxu0 0
        %639 = vmatpush2.bf16.msra.mxu0 %v584
        %640 = vmatprep.mubr.bf16.mxu0 %v470
        %641 = vmatmul.mubr.bf16.gmra.mxu0 %v469
        %v642 = vpop.f32.mrf.mxu0
        %v643 = vadd.f32 %v510, %v642
        %v644 = vpop.f32.mrf.mxu0
        %v645 = vpop.f32.mrf.mxu0
        %v646 = vadd.f32 %v510, %v645
        %v647 = vpop.f32.mrf.mxu0
        %648 = vmatprep.mubr.bf16.mxu0 %v472
        %649 = vmatmul.mubr.bf16.gmra.mxu0 %v471
        %v650 = vpop.f32.mrf.mxu0
        %v651 = vadd.f32 %v510, %v650
        %v652 = vpop.f32.mrf.mxu0
        %v653 = vpop.f32.mrf.mxu0
        %v654 = vadd.f32 %v510, %v653
        %v655 = vpop.f32.mrf.mxu0
        %656 = vdwg.mxu0
        %v657 = vmax.f32 %v643, 0.0
        %v658 = vmax.f32 %v646, 0.0
        %v659 = vmax.f32 %v651, 0.0
        %v660 = vmax.f32 %v654, 0.0
        %v661 = vpack.c.bf16 %v658, %v657
        %v662 = vpack.c.bf16 %v660, %v659
        %v663 = vld [vmem:[%s5] sm:$0xff]
        %v664 = vld [vmem:[%s5 + $0x8] sm:$0xff]
        %v665 = vld [vmem:[%s5 + $0x10] sm:$0xff]
        %v666 = vld [vmem:[%s5 + $0x18] sm:$0xff]
        %v667 = vld [vmem:[%s6] sm:$0x3]
        %v669 = vlaneseq
        %v670 = vshrl.u32 %v669, 7
        %v671 = vsub.s32 0, %v670
        %v672 = vrot.slane %v667, %v671
        %v673 = vlaneseq
        %v674 = vshrl.u32 %v673, 7
        %v675 = vsub.s32 1, %v674
        %v676 = vrot.slane %v667, %v675
        %v683 = vunpack.c.l.b16 %v663
        %v684 = vunpack.c.h.b16 %v663
        %v685 = vunpack.c.l.b16 %v664
        %v686 = vunpack.c.h.b16 %v664
        %v687 = vunpack.c.l.b16 %v665
        %v688 = vunpack.c.h.b16 %v665
        %v689 = vunpack.c.l.b16 %v666
        %v690 = vunpack.c.h.b16 %v666
        %v691 = vpack.c.b16 %v685, %v683
        %v692 = vpack.c.b16 %v686, %v684
        %v693 = vpack.c.b16 %v689, %v687
        %v694 = vpack.c.b16 %v690, %v688
        %vm699 = vcmask 261120
        %v701 = vsel %vm699, %v661, 0
        %v704 = vsel %vm699, %v662, 0
        %706 = vmatprep.subr.bf16.mxu0 0
        %707 = vmatpush1.bf16.msra.mxu0 0
        %708 = vmatprep.subr.bf16.mxu0 0
        %709 = vmatpush1.bf16.msra.mxu0 0
        %710 = vmatprep.subr.bf16.mxu0 0
        %711 = vmatpush1.bf16.msra.mxu0 0
        %712 = vmatprep.subr.bf16.mxu0 0
        %713 = vmatpush1.bf16.msra.mxu0 0
        %714 = vmatprep.subr.bf16.mxu0 0
        %715 = vmatpush1.bf16.msra.mxu0 0
        %716 = vmatprep.subr.bf16.mxu0 0
        %717 = vmatpush1.bf16.msra.mxu0 0
        %718 = vmatprep.subr.bf16.mxu0 %v694
        %719 = vmatpush1.bf16.msra.mxu0 %v693
        %720 = vmatprep.subr.bf16.mxu0 %v692
        %721 = vmatpush1.bf16.msra.mxu0 %v691
        %722 = vmatprep.subr.bf16.mxu0 0
        %723 = vmatpush2.bf16.msra.mxu0 0
        %724 = vmatprep.subr.bf16.mxu0 0
        %725 = vmatpush2.bf16.msra.mxu0 0
        %726 = vmatprep.subr.bf16.mxu0 0
        %727 = vmatpush2.bf16.msra.mxu0 0
        %728 = vmatprep.subr.bf16.mxu0 0
        %729 = vmatpush2.bf16.msra.mxu0 0
        %730 = vmatprep.subr.bf16.mxu0 0
        %731 = vmatpush2.bf16.msra.mxu0 0
        %732 = vmatprep.subr.bf16.mxu0 0
        %733 = vmatpush2.bf16.msra.mxu0 0
        %734 = vmatprep.subr.bf16.mxu0 0
        %735 = vmatpush2.bf16.msra.mxu0 0
        %736 = vmatprep.subr.bf16.mxu0 0
        %737 = vmatpush2.bf16.msra.mxu0 0
        %738 = vmatprep.mubr.bf16.mxu0 0
        %739 = vmatmul.mubr.bf16.gmra.mxu0 %v701
        %v740 = vpop.f32.mrf.mxu0
        %v741 = vadd.f32 %v672, %v740
        %v742 = vpop.f32.mrf.mxu0
        %v743 = vadd.f32 %v676, %v742
        %v744 = vpop.f32.mrf.mxu0
        %v745 = vadd.f32 %v672, %v744
        %v746 = vpop.f32.mrf.mxu0
        %v747 = vadd.f32 %v676, %v746
        %748 = vmatprep.mubr.bf16.mxu0 0
        %749 = vmatmul.mubr.bf16.gmra.mxu0 %v704
        %v750 = vpop.f32.mrf.mxu0
        %v751 = vadd.f32 %v672, %v750
        %v752 = vpop.f32.mrf.mxu0
        %v753 = vadd.f32 %v676, %v752
        %v754 = vpop.f32.mrf.mxu0
        %v755 = vadd.f32 %v672, %v754
        %v756 = vpop.f32.mrf.mxu0
        %v757 = vadd.f32 %v676, %v756
        %758 = vdwg.mxu0
        %v759 = vmax.f32 %v741, 0.0
        %v760 = vmax.f32 %v743, 0.0
        %v761 = vmax.f32 %v745, 0.0
        %v762 = vmax.f32 %v747, 0.0
        %v763 = vmax.f32 %v751, 0.0
        %v764 = vmax.f32 %v753, 0.0
        %v765 = vmax.f32 %v755, 0.0
        %v766 = vmax.f32 %v757, 0.0
        %v767 = vpack.c.bf16 %v761, %v759
        %v768 = vpack.c.bf16 %v762, %v760
        %v769 = vpack.c.bf16 %v765, %v763
        %v770 = vpack.c.bf16 %v766, %v764
        %v771 = vld [vmem:[%s7] sm:$0xf]
        %v772 = vld [vmem:[%s7 + $0x4] sm:$0xf]
        %v773 = vld [vmem:[%s7 + $0x8] sm:$0xf]
        %v774 = vld [vmem:[%s7 + $0xc] sm:$0xf]
        %v775 = vld [vmem:[%s7 + $0x10] sm:$0xf]
        %v776 = vld [vmem:[%s7 + $0x14] sm:$0xf]
        %v777 = vld [vmem:[%s7 + $0x18] sm:$0xf]
        %v778 = vld [vmem:[%s7 + $0x1c] sm:$0xf]
        %v779 = vld [vmem:[%s7 + $0x20] sm:$0xf]
        %v780 = vld [vmem:[%s7 + $0x24] sm:$0xf]
        %v781 = vld [vmem:[%s7 + $0x28] sm:$0xf]
        %v782 = vld [vmem:[%s7 + $0x2c] sm:$0xf]
        %v783 = vld [vmem:[%s7 + $0x30] sm:$0xf]
        %v784 = vld [vmem:[%s7 + $0x34] sm:$0xf]
        %v785 = vld [vmem:[%s7 + $0x38] sm:$0xf]
        %v786 = vld [vmem:[%s7 + $0x3c] sm:$0xf]
        %v787 = vld [vmem:[%s7 + $0x40] sm:$0xf]
        %v788 = vld [vmem:[%s7 + $0x44] sm:$0xf]
        %v789 = vld [vmem:[%s7 + $0x48] sm:$0xf]
        %v790 = vld [vmem:[%s7 + $0x4c] sm:$0xf]
        %v791 = vld [vmem:[%s7 + $0x50] sm:$0xf]
        %v792 = vld [vmem:[%s7 + $0x54] sm:$0xf]
        %v793 = vld [vmem:[%s7 + $0x58] sm:$0xf]
        %v794 = vld [vmem:[%s7 + $0x5c] sm:$0xf]
        %v795 = vld [vmem:[%s7 + $0x60] sm:$0xf]
        %v796 = vld [vmem:[%s7 + $0x64] sm:$0xf]
        %v797 = vld [vmem:[%s7 + $0x68] sm:$0xf]
        %v798 = vld [vmem:[%s7 + $0x6c] sm:$0xf]
        %v799 = vld [vmem:[%s7 + $0x70] sm:$0xf]
        %v800 = vld [vmem:[%s7 + $0x74] sm:$0xf]
        %v801 = vld [vmem:[%s7 + $0x78] sm:$0xf]
        %v802 = vld [vmem:[%s7 + $0x7c] sm:$0xf]
        %v803 = vld [vmem:[%s8] sm:$0x1]
        %v805 = vlaneseq
        %v806 = vshrl.u32 %v805, 7
        %v807 = vsub.s32 0, %v806
        %v808 = vrot.slane %v803, %v807
        %v842 = vunpack.c.l.b16 %v771
        %v843 = vunpack.c.l.b16 %v772
        %v844 = vunpack.c.l.b16 %v773
        %v845 = vunpack.c.l.b16 %v774
        %v846 = vunpack.c.l.b16 %v775
        %v847 = vunpack.c.l.b16 %v776
        %v848 = vunpack.c.l.b16 %v777
        %v849 = vunpack.c.l.b16 %v778
        %v850 = vunpack.c.l.b16 %v779
        %v851 = vunpack.c.l.b16 %v780
        %v852 = vunpack.c.l.b16 %v781
        %v853 = vunpack.c.l.b16 %v782
        %v854 = vunpack.c.l.b16 %v783
        %v855 = vunpack.c.l.b16 %v784
        %v856 = vunpack.c.l.b16 %v785
        %v857 = vunpack.c.l.b16 %v786
        %v858 = vunpack.c.l.b16 %v787
        %v859 = vunpack.c.l.b16 %v788
        %v860 = vunpack.c.l.b16 %v789
        %v861 = vunpack.c.l.b16 %v790
        %v862 = vunpack.c.l.b16 %v791
        %v863 = vunpack.c.l.b16 %v792
        %v864 = vunpack.c.l.b16 %v793
        %v865 = vunpack.c.l.b16 %v794
        %v866 = vunpack.c.l.b16 %v795
        %v867 = vunpack.c.l.b16 %v796
        %v868 = vunpack.c.l.b16 %v797
        %v869 = vunpack.c.l.b16 %v798
        %v870 = vunpack.c.l.b16 %v799
        %v871 = vunpack.c.l.b16 %v800
        %v872 = vunpack.c.l.b16 %v801
        %v873 = vunpack.c.l.b16 %v802
        %v874 = vpack.c.b16 %v843, %v842
        %v875 = vpack.c.b16 %v845, %v844
        %v876 = vpack.c.b16 %v847, %v846
        %v877 = vpack.c.b16 %v849, %v848
        %v878 = vpack.c.b16 %v851, %v850
        %v879 = vpack.c.b16 %v853, %v852
        %v880 = vpack.c.b16 %v855, %v854
        %v881 = vpack.c.b16 %v857, %v856
        %v882 = vpack.c.b16 %v859, %v858
        %v883 = vpack.c.b16 %v861, %v860
        %v884 = vpack.c.b16 %v863, %v862
        %v885 = vpack.c.b16 %v865, %v864
        %v886 = vpack.c.b16 %v867, %v866
        %v887 = vpack.c.b16 %v869, %v868
        %v888 = vpack.c.b16 %v871, %v870
        %v889 = vpack.c.b16 %v873, %v872
        %906 = vmatprep.subr.bf16.mxu0 0
        %907 = vmatpush1.bf16.msra.mxu0 %v881
        %908 = vmatprep.subr.bf16.mxu0 0
        %909 = vmatpush1.bf16.msra.mxu0 %v880
        %910 = vmatprep.subr.bf16.mxu0 0
        %911 = vmatpush1.bf16.msra.mxu0 %v879
        %912 = vmatprep.subr.bf16.mxu0 0
        %913 = vmatpush1.bf16.msra.mxu0 %v878
        %914 = vmatprep.subr.bf16.mxu0 0
        %915 = vmatpush1.bf16.msra.mxu0 %v877
        %916 = vmatprep.subr.bf16.mxu0 0
        %917 = vmatpush1.bf16.msra.mxu0 %v876
        %918 = vmatprep.subr.bf16.mxu0 0
        %919 = vmatpush1.bf16.msra.mxu0 %v875
        %920 = vmatprep.subr.bf16.mxu0 0
        %921 = vmatpush1.bf16.msra.mxu0 %v874
        %922 = vmatprep.subr.bf16.mxu0 0
        %923 = vmatpush2.bf16.msra.mxu0 %v889
        %924 = vmatprep.subr.bf16.mxu0 0
        %925 = vmatpush2.bf16.msra.mxu0 %v888
        %926 = vmatprep.subr.bf16.mxu0 0
        %927 = vmatpush2.bf16.msra.mxu0 %v887
        %928 = vmatprep.subr.bf16.mxu0 0
        %929 = vmatpush2.bf16.msra.mxu0 %v886
        %930 = vmatprep.subr.bf16.mxu0 0
        %931 = vmatpush2.bf16.msra.mxu0 %v885
        %932 = vmatprep.subr.bf16.mxu0 0
        %933 = vmatpush2.bf16.msra.mxu0 %v884
        %934 = vmatprep.subr.bf16.mxu0 0
        %935 = vmatpush2.bf16.msra.mxu0 %v883
        %936 = vmatprep.subr.bf16.mxu0 0
        %937 = vmatpush2.bf16.msra.mxu0 %v882
        %938 = vmatprep.mubr.bf16.mxu0 %v768
        %939 = vmatmul.mubr.bf16.gmra.mxu0 %v767
        %v940 = vpop.f32.mrf.mxu0
        %v941 = vadd.f32 %v808, %v940
        %v942 = vpop.f32.mrf.mxu0
        %v943 = vpop.f32.mrf.mxu0
        %v944 = vadd.f32 %v808, %v943
        %v945 = vpop.f32.mrf.mxu0
        %946 = vmatprep.mubr.bf16.mxu0 %v770
        %947 = vmatmul.mubr.bf16.gmra.mxu0 %v769
        %v948 = vpop.f32.mrf.mxu0
        %v949 = vadd.f32 %v808, %v948
        %v950 = vpop.f32.mrf.mxu0
        %v951 = vpop.f32.mrf.mxu0
        %v952 = vadd.f32 %v808, %v951
        %v953 = vpop.f32.mrf.mxu0
        %954 = vdwg.mxu0
        %955 = vst.msk [vmem:[%s326] sm:$0xff] %vm401, %v941
        %956 = vst.msk [vmem:[%s326 + $0x8] sm:$0xff] %vm401, %v944
        %957 = vst.msk [vmem:[%s326 + $0x10] sm:$0xff] %vm401, %v949
        %958 = vst.msk [vmem:[%s326 + $0x18] sm:$0xff] %vm401, %v952
        %s959 = sand.u32 %s225, 1
        %s960 = scalar_lea.sflag [#allocation3], %s959
        %s961 = sand.u32 %s225, 1
        %s962 = smul.addr %s961, 32
        %s963 = scalar_lea.vmem [#allocation2], %s962
        // Predicated region
        $region57: #{autoencoder_forward.1} parent=55 // pred_check
          %p964 = pneg %p235
        $region58: #{autoencoder_forward.1} parent=55 // pred_check_branch
          %966 = sbr.rel (%p964) target = $region60
        $region59: #{autoencoder_forward.1} parent=55 // pred_region
          %s967 = smul.u32 4, %s23
          %s969 = ssub.s32 512, 512
          %970 = vsyncadd %s960, %s969
          %s971 = smul.addr %s967, 128
          %s972 = scalar_lea.hbm %s9, %s971
          %s973 = sshll.u32 %s963, 4
          %s974 = int_to_ptr.vmem [resolvable:$true] %s973
          %979 = dma.vmem_to_hbm [thread:$0]  %s974, 512, %s972, %s960, 128, 128, 8
        $region60: #{autoencoder_forward.1} parent=55 // pred_fallthru
          _
      $region56: #{autoencoder_forward.1} parent=5 // pred_fallthru
        _
      %p980 = scmp.le.s32.totalorder 2, %s18
      // Predicated region
      $region61: #{autoencoder_forward.1} parent=5 // pred_check
        %p981 = pneg %p980
      $region62: #{autoencoder_forward.1} parent=5 // pred_check_branch
        %983 = sbr.rel (%p981) target = $region64
      $region63: #{autoencoder_forward.1} parent=5 // pred_region
        %s984 = ssub.s32 %s18, 2
        // Predicated region
        $region65: #{autoencoder_forward.1} parent=63 // pred_check
          %p985 = pneg %p241
        $region66: #{autoencoder_forward.1} parent=63 // pred_check_branch
          %987 = sbr.rel (%p985) target = $region68
        $region67: #{autoencoder_forward.1} parent=63 // pred_region
          %s988 = sand.u32 %s226, 1
          %s989 = scalar_lea.sflag [#allocation3], %s988
          %s990 = sand.u32 %s226, 1
          %s991 = smul.addr %s990, 32
          %s992 = scalar_lea.vmem [#allocation2], %s991
          %993 = dma.done %s989, 512
        $region68: #{autoencoder_forward.1} parent=63 // pred_fallthru
          _
      $region64: #{autoencoder_forward.1} parent=5 // pred_fallthru
        _
    $region6: #{autoencoder_forward.1} parent=1 // loop_footer
      %s22 = sadd.s32 1, %s18
    $region7: #{autoencoder_forward.1} parent=1 // loop_footer_branch
      %17 = sbr.rel target = $region3
    $region8: #{autoencoder_forward.1} parent=1 // loop_exit
      _
    %994 = vsyncpa [#allocation3], 1
    %s995 = scalar_lea.sflag [#allocation3], 1
    %996 = vsyncpa %s995, 1

</llo_original>
